<compile_context>
chip_gen: v5e
topology: v5e:2x2
jax: 0.10.0
libtpu: 0.0.40
codegen_flags: <defaults>
</compile_context>

<pallas_src>
import jax
import jax.numpy as jnp
from jax.experimental import pallas as pl
from jax.experimental.pallas import tpu as pltpu

LEAKY_SLOPE = 0.01          # nn.LeakyReLU default
LN_EPS = 1e-5               # nn.LayerNorm default
VMEM_LIMIT = 64 * 1024 * 1024   # explicit budget; <= physical on v5e/v6e/v7x


def _leaky(x):
    return jnp.where(x > 0, x, LEAKY_SLOPE * x)


def _pick_bb(batch, dsum, lanes_target=256):
    """Graphs per grid step so bb*dsum >= lanes_target (and bb | batch)."""
    bb = max(1, lanes_target // max(dsum, 1))
    bb = min(bb, batch)
    while batch % bb:
        bb -= 1
    return bb


# -----------------------------------------------------------------------------
# Kernel 1: fused node_state_interface + feat_ff.
#   leaky(x @ [W_nsi | W_ff] + [b_nsi | b_ff])  ->  lane-dense bf16 (N, B*dsum)
# -----------------------------------------------------------------------------
def input_linear_kernel(x_ref, w_ref, b_ref, o_ref):
    x = x_ref[0].astype(jnp.bfloat16)                        # (tn, d_in)
    y = jnp.dot(x, w_ref[...], preferred_element_type=jnp.float32) + b_ref[...]
    o_ref[...] = _leaky(y).astype(jnp.bfloat16)              # bf16 lane-dense store


def fused_input_linear(features, w16, bias, *, tile_n=256):
    b, n, d_in = features.shape
    dsum = w16.shape[1]
    # Pick a node tile that divides N (no degenerate full-block fallback for
    # typical N; if N has no multiple-of-8 divisor we fall back to the full dim).
    tn = n
    for cand in (tile_n, 128, 64, 32, 16, 8):
        if cand <= n and n % cand == 0:
            tn = cand
            break
    return pl.pallas_call(
        input_linear_kernel,
        out_shape=jax.ShapeDtypeStruct((n, b * dsum), jnp.bfloat16),
        grid=(n // tn, b),
        in_specs=[
            pl.BlockSpec((1, tn, d_in), lambda i, j: (j, i, 0)),
            pl.BlockSpec((d_in, dsum), lambda i, j: (0, 0)),   # weight resident
            pl.BlockSpec((1, dsum), lambda i, j: (0, 0)),      # fused bias
        ],
        out_specs=pl.BlockSpec((tn, dsum), lambda i, j: (i, j)),
        compiler_params=pltpu.CompilerParams(
            dimension_semantics=("parallel", "parallel"),
            vmem_limit_bytes=VMEM_LIMIT),
    )(features, w16, bias)


# -----------------------------------------------------------------------------
# Kernel 2 (T > 1 only): propagate-only step, bf16 in / bf16 out.
# TODO(synk): NodePseudoSubsystem recurrence (pnode_state feedback) source
# unavailable; stand-in just re-propagates the fused slab.
# -----------------------------------------------------------------------------
def propagate_kernel(a_ref, fns_ref, o_ref):
    o_ref[...] = _leaky(
        jnp.dot(a_ref[...], fns_ref[...], preferred_element_type=jnp.float32)
    ).astype(jnp.bfloat16)


def propagate_step(adj16, fns, *, batch):
    n = adj16.shape[0]
    dsum = fns.shape[1] // batch
    bb = _pick_bb(batch, dsum)
    return pl.pallas_call(
        propagate_kernel,
        out_shape=jax.ShapeDtypeStruct(fns.shape, jnp.bfloat16),
        grid=(batch // bb,),
        in_specs=[pl.BlockSpec((n, n), lambda i: (0, 0)),
                  pl.BlockSpec((n, bb * dsum), lambda i: (0, i))],
        out_specs=pl.BlockSpec((n, bb * dsum), lambda i: (0, i)),
        compiler_params=pltpu.CompilerParams(
            dimension_semantics=("parallel",),
            vmem_limit_bytes=VMEM_LIMIT),
    )(adj16, fns)


# -----------------------------------------------------------------------------
# Kernel 3: fused node_state_updater + output head, bb graphs per grid step.
# No fns writeback (dead output for the final/only iteration).
# TODO(synk): NodePseudoSubsystem / PathIntegral source not provided; the
# cross-attention + per-head projection + class readout are stand-ins.
# -----------------------------------------------------------------------------
def updater_head_kernel(bagg_ref, a_ref, fns_ref, pn_ref, wh_ref, wagg_ref,
                        gamma_ref, beta_ref, cn_ref, out_ref):
    bb = out_ref.shape[1]
    n_pnode, q_dim = pn_ref.shape
    dsum = fns_ref.shape[1] // bb
    n_q = wh_ref.shape[1] // q_dim

    # One lane-dense MXU pass propagates all bb graphs: A @ [ns | feat]_0..bb.
    fns_new = _leaky(jnp.dot(a_ref[...], fns_ref[...],
                             preferred_element_type=jnp.float32))  # (N, bb*dsum) f32

    pn16 = pn_ref[...]            # (P, q_dim) bf16 (cast hoisted to wrapper)
    wh16 = wh_ref[...]            # (q_dim, n_q*q_dim) bf16
    wagg = wagg_ref[...]          # (P, n_q) f32
    gamma = gamma_ref[...]
    beta = beta_ref[...]
    cn = cn_ref[...]              # (q_dim, nclass) f32
    scale = 1.0 / float(q_dim) ** 0.5

    rows = []
    for g in range(bb):           # static unroll over the graphs in this block
        # node_state slab of graph g; cast to bf16 ONCE, reused by both dots.
        ns16 = fns_new[:, g * dsum:g * dsum + q_dim].astype(jnp.bfloat16)

        # Pseudo-node cross-attention over real nodes (contract on last dims).
        scores = jax.lax.dot_general(
            pn16, ns16, (((1,), (1,)), ((), ())),
            preferred_element_type=jnp.float32) * scale            # (P, N)
        scores = scores - jnp.max(scores, axis=-1, keepdims=True)
        p = jnp.exp(scores)
        attn = p / jnp.sum(p, axis=-1, keepdims=True)               # exact softmax
        agg = jnp.dot(attn.astype(jnp.bfloat16), ns16,
                      preferred_element_type=jnp.float32)           # (P, q_dim)

        # Per-head projection -> (P, n_q*q_dim), f32 elementwise.
        pn_flat = _leaky(jnp.dot(agg.astype(jnp.bfloat16), wh16,
                                 preferred_element_type=jnp.float32))

        # pnode_agg: Linear(n_pnode*n_q, 1) over the (p, h) axis, done with
        # static lane slices + sublane reductions (no relayout reshape).
        pooled = jnp.zeros((1, q_dim), jnp.float32) + bagg_ref[0]
        for h in range(n_q):
            chunk = pn_flat[:, h * q_dim:(h + 1) * q_dim]           # (P, q_dim)
            pooled = pooled + jnp.sum(wagg[:, h:h + 1] * chunk,
                                      axis=0, keepdims=True)
        pooled = _leaky(pooled)

        # out_norm: LayerNorm over q_dim (f32 statistics).
        mu = jnp.mean(pooled, axis=-1, keepdims=True)
        var = jnp.mean((pooled - mu) ** 2, axis=-1, keepdims=True)
        normed = (pooled - mu) * jax.lax.rsqrt(var + LN_EPS) * gamma + beta

        # TODO(synk): PathIntegral source not provided; stand-in readout = dot
        # with the class_neuron bank pre-averaged over its n_c heads.
        logits = jnp.dot(normed, cn, preferred_element_type=jnp.float32)

        # get_output for 'single-class': log_softmax over classes.
        logits = logits - jnp.max(logits, axis=-1, keepdims=True)
        lse = jnp.log(jnp.sum(jnp.exp(logits), axis=-1, keepdims=True))
        rows.append(logits - lse)                                   # (1, nclass)

    out_ref[0] = jnp.concatenate(rows, axis=0)                      # (bb, nclass)


def node_updater_head(b_agg, adj16, fns, pn16, wh16, wagg, gamma, beta, cn,
                      *, batch):
    n = adj16.shape[0]
    dsum = fns.shape[1] // batch
    n_pnode, q_dim = pn16.shape
    n_q = wh16.shape[1] // q_dim
    nclass = cn.shape[1]
    bb = _pick_bb(batch, dsum)
    out = pl.pallas_call(
        updater_head_kernel,
        out_shape=jax.ShapeDtypeStruct((batch // bb, bb, nclass), jnp.float32),
        grid=(batch // bb,),
        in_specs=[
            pl.BlockSpec(memory_space=pltpu.MemorySpace.SMEM),      # b_agg scalar
            pl.BlockSpec((n, n), lambda i: (0, 0)),                 # adjacency
            pl.BlockSpec((n, bb * dsum), lambda i: (0, i)),         # fns lane block
            pl.BlockSpec((n_pnode, q_dim), lambda i: (0, 0)),
            pl.BlockSpec((q_dim, n_q * q_dim), lambda i: (0, 0)),
            pl.BlockSpec((n_pnode, n_q), lambda i: (0, 0)),
            pl.BlockSpec((1, q_dim), lambda i: (0, 0)),
            pl.BlockSpec((1, q_dim), lambda i: (0, 0)),
            pl.BlockSpec((q_dim, nclass), lambda i: (0, 0)),
        ],
        out_specs=pl.BlockSpec((1, bb, nclass), lambda i: (i, 0, 0)),
        compiler_params=pltpu.CompilerParams(
            dimension_semantics=("parallel",),      # shards across v7x megacore
            vmem_limit_bytes=VMEM_LIMIT),
    )(b_agg, adj16, fns, pn16, wh16, wagg, gamma, beta, cn)
    return out.reshape(batch, nclass)


# -----------------------------------------------------------------------------
# Glue: parameter init + adjacency + full forward.
# -----------------------------------------------------------------------------
def init_params(key, *, d_in, d_model, q_dim, n_q, n_c, n_pnode, nclass):
    ks = jax.random.split(key, 8)
    s = 0.1
    return {
        "w_nsi": s * jax.random.normal(ks[0], (d_in, q_dim), jnp.float32),
        "b_nsi": jnp.zeros((1, q_dim), jnp.float32),
        "w_ff": s * jax.random.normal(ks[1], (d_in, d_model), jnp.float32),
        "b_ff": jnp.zeros((1, d_model), jnp.float32),
        "pnode_state": jax.random.normal(ks[2], (n_pnode, q_dim), jnp.float32),
        # TODO(synk): stand-in per-head projection params for NodePseudoSubsystem.
        "w_heads": s * jax.random.normal(ks[3], (q_dim, n_q * q_dim), jnp.float32),
        "w_agg": s * jax.random.normal(ks[4], (1, n_pnode * n_q), jnp.float32),
        "b_agg": jnp.zeros((1,), jnp.float32),
        "ln_gamma": jnp.ones((1, q_dim), jnp.float32),
        "ln_beta": jnp.zeros((1, q_dim), jnp.float32),
        # class_neuron, stored pre-transposed as (n_c, q_dim, nclass).
        "class_neuron_t": jax.random.normal(ks[5], (n_c, q_dim, nclass), jnp.float32),
    }


def normalized_adjacency(n):
    # Ring graph + self loops, symmetrically normalized (D^-1/2 A D^-1/2);
    # dense-JAX equivalent of _get_sparse_normalized_adj + add_remaining_self_loops.
    idx = jnp.arange(n)
    adj = jnp.zeros((n, n), jnp.float32)
    adj = adj.at[idx, (idx + 1) % n].set(1.0)
    adj = adj.at[(idx + 1) % n, idx].set(1.0)
    adj = adj + jnp.eye(n, dtype=jnp.float32)
    deg = adj.sum(-1)
    dinv = jnp.where(deg > 0, 1.0 / jnp.sqrt(deg), 0.0)
    return adj * dinv[:, None] * dinv[None, :]


def n2graph_forward(params, features, adj_norm, *, T=1):
    b, n, d_in = features.shape
    q_dim = params["w_nsi"].shape[1]
    n_pnode = params["pnode_state"].shape[0]
    n_q = params["w_heads"].shape[1] // q_dim

    # Fused [node_state | feature] projection; bias added inside the kernel.
    w_fused = jnp.concatenate([params["w_nsi"], params["w_ff"]],
                              axis=-1).astype(jnp.bfloat16)     # (d_in, dsum)
    b_fused = jnp.concatenate([params["b_nsi"], params["b_ff"]], axis=-1)

    fns = fused_input_linear(features, w_fused, b_fused)        # (N, B*dsum) bf16

    # Parameter casts hoisted out of the grid loops.
    adj16 = adj_norm.astype(jnp.bfloat16)
    pn16 = params["pnode_state"].astype(jnp.bfloat16)
    wh16 = params["w_heads"].astype(jnp.bfloat16)
    wagg = params["w_agg"].reshape(n_pnode, n_q)    # PyTorch flatten order p*n_q + h
    cn_mean = jnp.mean(params["class_neuron_t"], axis=0)        # (q_dim, nclass)

    for _ in range(T - 1):
        # TODO(synk): NodePseudoSubsystem recurrence source unavailable;
        # stand-in propagates the fused slab (bf16 in / bf16 out).
        fns = propagate_step(adj16, fns, batch=b)

    # Final iteration fuses the updater with the whole output head; no dead
    # fns writeback.
    return node_updater_head(params["b_agg"], adj16, fns, pn16, wh16, wagg,
                             params["ln_gamma"], params["ln_beta"], cn_mean,
                             batch=b)                           # (B, nclass) log-probs


if __name__ == "__main__":
    B, N = 4, 16
    D_IN, D_MODEL, Q_DIM = 4, 64, 64          # dsum = 128 -> lane-dense fns slab
    N_Q, N_C, N_PNODE, NCLASS = 4, 4, 8, 3

    key = jax.random.PRNGKey(0)
    k_params, k_x = jax.random.split(key)
    params = init_params(k_params, d_in=D_IN, d_model=D_MODEL, q_dim=Q_DIM,
                         n_q=N_Q, n_c=N_C, n_pnode=N_PNODE, nclass=NCLASS)

    x = jax.random.normal(k_x, (B, N, D_IN), jnp.float32)
    adj = normalized_adjacency(N)              # single shared (N, N) adjacency

    out = n2graph_forward(params, x, adj, T=1)
    out = jax.block_until_ready(out)
    assert out.shape == (B, NCLASS)
    assert bool(jnp.all(jnp.isfinite(out)))
    print("KERNEL_OK")
</pallas_src>

<mosaic_0001>
module attributes {stable_mosaic.version = 11 : i64} {
  func.func @input_linear_kernel(%arg0: i32, %arg1: i32, %arg2: memref<1x16x4xf32, #tpu.memory_space<vmem>>, %arg3: memref<4x128xbf16, #tpu.memory_space<vmem>>, %arg4: memref<1x128xf32, #tpu.memory_space<vmem>>, %arg5: memref<16x128xbf16, #tpu.memory_space<vmem>>) attributes {dimension_semantics = [#tpu.dimension_semantics<parallel>, #tpu.dimension_semantics<parallel>], iteration_bounds = array<i64: 1, 4>, scalar_prefetch = 0 : i64, scratch_operands = 0 : i64, tpu.core_type = #tpu.core_type<tc>, window_params = [{transform_indices = @transform_0, window_bounds = array<i64: 1, 16, 4>}, {pipeline_mode = #tpu.pipeline_mode<synchronous>, transform_indices = @transform_1, window_bounds = array<i64: 4, 128>}, {pipeline_mode = #tpu.pipeline_mode<synchronous>, transform_indices = @transform_2, window_bounds = array<i64: 1, 128>}, {transform_indices = @transform_3, window_bounds = array<i64: 16, 128>}]} {
    %c0 = arith.constant 0 : index
    %c0_0 = arith.constant 0 : index
    %c0_1 = arith.constant 0 : index
    %0 = vector.load %arg2[%c0, %c0_0, %c0_1] : memref<1x16x4xf32, #tpu.memory_space<vmem>>, vector<1x16x4xf32>
    %1 = vector.shape_cast %0 : vector<1x16x4xf32> to vector<16x4xf32>
    %2 = arith.truncf %1 : vector<16x4xf32> to vector<16x4xbf16>
    %c0_2 = arith.constant 0 : index
    %c0_3 = arith.constant 0 : index
    %3 = vector.load %arg3[%c0_2, %c0_3] : memref<4x128xbf16, #tpu.memory_space<vmem>>, vector<4x128xbf16>
    %cst = arith.constant dense<0.000000e+00> : vector<16x128xf32>
    %4 = tpu.matmul %2, %3, %cst {dimension_numbers = #tpu.dot_dimension_numbers<[1], [0], [0], [1], [0, 0, 1, 1], [], []>} : vector<16x4xbf16>, vector<4x128xbf16>, vector<16x128xf32> -> vector<16x128xf32>
    %c0_4 = arith.constant 0 : index
    %c0_5 = arith.constant 0 : index
    %5 = vector.load %arg4[%c0_4, %c0_5] : memref<1x128xf32, #tpu.memory_space<vmem>>, vector<1x128xf32>
    %6 = vector.broadcast %5 : vector<1x128xf32> to vector<16x128xf32>
    %7 = arith.addf %4, %6 : vector<16x128xf32>
    %cst_6 = arith.constant 0.000000e+00 : f32
    %8 = vector.broadcast %cst_6 : f32 to vector<16x128xf32>
    %9 = arith.cmpf ogt, %7, %8 : vector<16x128xf32>
    %cst_7 = arith.constant 0.00999999977 : f32
    %10 = vector.broadcast %cst_7 : f32 to vector<16x128xf32>
    %11 = arith.mulf %10, %7 : vector<16x128xf32>
    %12 = arith.select %9, %7, %11 : vector<16x128xi1>, vector<16x128xf32>
    %13 = arith.truncf %12 : vector<16x128xf32> to vector<16x128xbf16>
    %c0_8 = arith.constant 0 : index
    %c0_9 = arith.constant 0 : index
    %14 = vector.load %arg5[%c0_8, %c0_9] : memref<16x128xbf16, #tpu.memory_space<vmem>>, vector<16x128xbf16>
    tpu.vector_store %arg5[%c0_8, %c0_9], %13 {strides = array<i32>} : memref<16x128xbf16, #tpu.memory_space<vmem>>, vector<16x128xbf16>,
    return
  }
  func.func @transform_0(%arg0: i32, %arg1: i32) -> (i32, i32, i32) {
    %c0_i32 = arith.constant 0 : i32
    %c0_i32_0 = arith.constant 0 : i32
    return %arg1, %arg0, %c0_i32 : i32, i32, i32
  }
  func.func @transform_1(%arg0: i32, %arg1: i32) -> (i32, i32) {
    %c0_i32 = arith.constant 0 : i32
    %c0_i32_0 = arith.constant 0 : i32
    %c0_i32_1 = arith.constant 0 : i32
    return %c0_i32, %c0_i32_0 : i32, i32
  }
  func.func @transform_2(%arg0: i32, %arg1: i32) -> (i32, i32) {
    %c0_i32 = arith.constant 0 : i32
    %c0_i32_0 = arith.constant 0 : i32
    %c0_i32_1 = arith.constant 0 : i32
    return %c0_i32, %c0_i32_0 : i32, i32
  }
  func.func @transform_3(%arg0: i32, %arg1: i32) -> (i32, i32) {
    %c0_i32 = arith.constant 0 : i32
    return %arg0, %arg1 : i32, i32
  }
}

</mosaic_0001>

<llo_original>
// kernel: tpu_custom_call.1
$region0: #{tpu_custom_call.1}
  #allocation0 [shape = 'u32[]', space=smem, size = 0x4, offset = 0x4, fixed_abs, tag = 'smem constant byte address 0x4 - core index']
  #allocation1 [shape = 'u32[72,128]{1,0:T(1,128)}', space=vmem, size = 0x9000, scoped, tag = 'internal scratch']
  %s0 = inlined_call_operand.vmem [shape: f32[4,16,4], index: 0, kind: input, shape index: {}]
  %s1 = inlined_call_operand.vmem [shape: bf16[4,128], index: 1, kind: input, shape index: {}]
  %s2 = inlined_call_operand.vmem [shape: f32[1,128], index: 2, kind: input, shape index: {}]
  %s3 = inlined_call_operand.hbm [shape: bf16[16,512], index: 3, kind: output, shape index: {}]
  %s4 = sld [smem:[#allocation0]]
  $region45: #{tpu_custom_call.1} parent=0
    _
  %s6 = ssub.s32 1, %s4
  %s7 = scalar_select 0, %s6, %s4
  $region1: #{tpu_custom_call.1} parent=0
    #allocation2 [shape = 'u8[8192]{0}', space=vmem, size = 0x2000, scoped, tag = 'output window, operand 0']
    #allocation3 [shape = 's32[2]{0}', space=sflag, size = 0x8, scoped, tag = 'scoped memory for tpu_custom_call.1']
    %8 = vsyncpa [#allocation3], 0
    %s9 = scalar_lea.sflag [#allocation3], 1
    %10 = vsyncpa %s9, 0
    loop: start=0, step=1, limit=6
    $region2: #{tpu_custom_call.1} parent=1 // loop_pre_header
      _
    $region3: #{tpu_custom_call.1} parent=1 // loop_header
      %s12 = sphi 0, %s16
      %p13 = scmp.ge.s32.totalorder %s12, 6
      %s19 = sphi 0, %s31
      %s20 = sphi 0, %s27
      %s21 = sphi 0, %s19
      %s22 = sphi 0, %s20
      %s23 = sphi 0, %s21
      %s24 = sphi 0, %s22
      %s36 = sphi 0, %s38
      %s39 = sphi 0, %s36
      %s40 = sphi 0, %s39
      %s56 = sphi 0, %s40
      %s60 = sphi 0, %s60
      %s62 = sphi 0, %s60
      %s63 = sphi 0, %s62
      %s77 = sphi 0, %s63
      %s81 = sphi 0, %s81
      %s83 = sphi 0, %s81
      %s84 = sphi 0, %s83
      %s98 = sphi 0, %s84
      %s106 = sphi 0, %s108
      %s109 = sphi 0, %s106
      %s110 = sphi 0, %s109
      %s126 = sphi 0, %s110
    $region4: #{tpu_custom_call.1} parent=1 // loop_header_branch
      %15 = sbr.rel (%p13) target = $region8
    $region5: #{tpu_custom_call.1} parent=1 // loop_body
      %s17 = ssub.s32 %s12, 1
      %s18 = ssub.s32 %s12, 2
      %s25 = sadd.s32 1, %s20
      %p26 = scmp.ge.s32.totalorder %s25, 4
      %s27 = scalar_select %p26, 0, %s25
      %s28 = sadd.s32 1, %s19
      %s29 = scalar_select %p26, %s28, %s19
      %p30 = scmp.ge.s32.totalorder %s29, 1
      %s31 = scalar_select %p30, 0, %s29
      %s32 = ssub.s32 %s20, %s27
      %s33 = ssub.s32 %s19, %s31
      %s34 = sor.u32 %s32, %s33
      %p35 = scmp.eq.s32.totalorder %s34, 0
      %s37 = sadd.s32 %s36, 1
      %s38 = scalar_select %p35, %s36, %s37
      %p41 = pneg %p35
      %p42 = scmp.eq.s32.totalorder %s12, 3
      %p43 = por %p41, %p42
      %p44 = scmp.ne.s32.totalorder %s36, %s39
      %p45 = scmp.eq.s32.totalorder %s12, 0
      %p46 = por %p44, %p45
      %p47 = scmp.ne.s32.totalorder %s36, %s39
      %p48 = scmp.eq.s32.totalorder %s17, 3
      %p49 = por %p47, %p48
      %p50 = scmp.ne.s32.totalorder %s39, %s40
      %p51 = scmp.eq.s32.totalorder %s17, 0
      %p52 = por %p50, %p51
      %p53 = scmp.ne.s32.totalorder %s39, %s40
      %p54 = scmp.eq.s32.totalorder %s18, 3
      %p55 = por %p53, %p54
      %p57 = scmp.ne.s32.totalorder %s40, %s56
      %p58 = scmp.eq.s32.totalorder %s18, 0
      %p59 = por %p57, %p58
      %s61 = sadd.s32 %s60, 1
      %p64 = scmp.eq.s32.totalorder %s12, 3
      %p65 = scmp.ne.s32.totalorder %s60, %s62
      %p66 = scmp.eq.s32.totalorder %s12, 0
      %p67 = por %p65, %p66
      %p68 = scmp.ne.s32.totalorder %s60, %s62
      %p69 = scmp.eq.s32.totalorder %s17, 3
      %p70 = por %p68, %p69
      %p71 = scmp.ne.s32.totalorder %s62, %s63
      %p72 = scmp.eq.s32.totalorder %s17, 0
      %p73 = por %p71, %p72
      %p74 = scmp.ne.s32.totalorder %s62, %s63
      %p75 = scmp.eq.s32.totalorder %s18, 3
      %p76 = por %p74, %p75
      %p78 = scmp.ne.s32.totalorder %s63, %s77
      %p79 = scmp.eq.s32.totalorder %s18, 0
      %p80 = por %p78, %p79
      %s82 = sadd.s32 %s81, 1
      %p85 = scmp.eq.s32.totalorder %s12, 3
      %p86 = scmp.ne.s32.totalorder %s81, %s83
      %p87 = scmp.eq.s32.totalorder %s12, 0
      %p88 = por %p86, %p87
      %p89 = scmp.ne.s32.totalorder %s81, %s83
      %p90 = scmp.eq.s32.totalorder %s17, 3
      %p91 = por %p89, %p90
      %p92 = scmp.ne.s32.totalorder %s83, %s84
      %p93 = scmp.eq.s32.totalorder %s17, 0
      %p94 = por %p92, %p93
      %p95 = scmp.ne.s32.totalorder %s83, %s84
      %p96 = scmp.eq.s32.totalorder %s18, 3
      %p97 = por %p95, %p96
      %p99 = scmp.ne.s32.totalorder %s84, %s98
      %p100 = scmp.eq.s32.totalorder %s18, 0
      %p101 = por %p99, %p100
      %s102 = ssub.s32 %s19, %s31
      %s103 = ssub.s32 %s20, %s27
      %s104 = sor.u32 %s102, %s103
      %p105 = scmp.eq.s32.totalorder %s104, 0
      %s107 = sadd.s32 %s106, 1
      %s108 = scalar_select %p105, %s106, %s107
      %p111 = pneg %p105
      %p112 = scmp.eq.s32.totalorder %s12, 3
      %p113 = por %p111, %p112
      %p114 = scmp.ne.s32.totalorder %s106, %s109
      %p115 = scmp.eq.s32.totalorder %s12, 0
      %p116 = por %p114, %p115
      %p117 = scmp.ne.s32.totalorder %s106, %s109
      %p118 = scmp.eq.s32.totalorder %s17, 3
      %p119 = por %p117, %p118
      %p120 = scmp.ne.s32.totalorder %s109, %s110
      %p121 = scmp.eq.s32.totalorder %s17, 0
      %p122 = por %p120, %p121
      %p123 = scmp.ne.s32.totalorder %s109, %s110
      %p124 = scmp.eq.s32.totalorder %s18, 3
      %p125 = por %p123, %p124
      %p127 = scmp.ne.s32.totalorder %s110, %s126
      %p128 = scmp.eq.s32.totalorder %s18, 0
      %p129 = por %p127, %p128
      %p130 = scmp.le.s32.totalorder 1, %s12
      %p131 = scmp.lt.s32.totalorder %s12, 5
      %p132 = pnand %p130, %p131
      %p133 = pneg %p132
      // Predicated region
      $region9: #{tpu_custom_call.1} parent=5 // pred_check
        _
      $region10: #{tpu_custom_call.1} parent=5 // pred_check_branch
        %135 = sbr.rel (%p132) target = $region12
      $region11: #{tpu_custom_call.1} parent=5 // pred_region
        %s136 = ssub.s32 %s12, 1
        // Predicated region
        $region13: #{tpu_custom_call.1} parent=11 // pred_check
          %p137 = pneg %p73
        $region14: #{tpu_custom_call.1} parent=11 // pred_check_branch
          %139 = sbr.rel (%p137) target = $region16
        $region15: #{tpu_custom_call.1} parent=11 // pred_region
          _
        $region16: #{tpu_custom_call.1} parent=11 // pred_fallthru
          _
        // Predicated region
        $region17: #{tpu_custom_call.1} parent=11 // pred_check
          %p140 = pneg %p94
        $region18: #{tpu_custom_call.1} parent=11 // pred_check_branch
          %142 = sbr.rel (%p140) target = $region20
        $region19: #{tpu_custom_call.1} parent=11 // pred_region
          _
        $region20: #{tpu_custom_call.1} parent=11 // pred_fallthru
          _
      $region12: #{tpu_custom_call.1} parent=5 // pred_fallthru
        _
      %p143 = scmp.lt.s32.totalorder %s12, 4
      // Predicated region
      $region21: #{tpu_custom_call.1} parent=5 // pred_check
        %p144 = pneg %p143
      $region22: #{tpu_custom_call.1} parent=5 // pred_check_branch
        %146 = sbr.rel (%p144) target = $region24
      $region23: #{tpu_custom_call.1} parent=5 // pred_region
        // Predicated region
        $region25: #{tpu_custom_call.1} parent=23 // pred_check
          %p147 = pneg %p46
        $region26: #{tpu_custom_call.1} parent=23 // pred_check_branch
          %149 = sbr.rel (%p147) target = $region28
        $region27: #{tpu_custom_call.1} parent=23 // pred_region
          %s150 = smul.u32 2, %s19
          %p151 = scmp.lt.s32.totalorder %s20, 3
          %s152 = scalar_select %p151, %s20, 3
          %p153 = scmp.lt.s32.totalorder %s150, 1
          %s154 = scalar_select %p153, %s150, 1
          %s155 = smul.addr %s152, 2
          %s156 = sadd.s32 %s154, %s155
          %s157 = smul.addr %s156, 8
          %s158 = scalar_lea.vmem %s0, %s157
          %s159 = smul.u32 2, %s19
        $region28: #{tpu_custom_call.1} parent=23 // pred_fallthru
          _
      $region24: #{tpu_custom_call.1} parent=5 // pred_fallthru
        _
      %p160 = scmp.le.s32.totalorder 1, %s12
      %p161 = scmp.lt.s32.totalorder %s12, 5
      %p162 = pnand %p160, %p161
      %p163 = pneg %p162
      // Predicated region
      $region29: #{tpu_custom_call.1} parent=5 // pred_check
        _
      $region30: #{tpu_custom_call.1} parent=5 // pred_check_branch
        %165 = sbr.rel (%p162) target = $region32
      $region31: #{tpu_custom_call.1} parent=5 // pred_region
        %s166 = ssub.s32 %s12, 1
        %s167 = smul.u32 2, %s21
        %p168 = scmp.lt.s32.totalorder %s22, 3
        %s169 = scalar_select %p168, %s22, 3
        %p170 = scmp.lt.s32.totalorder %s167, 1
        %s171 = scalar_select %p170, %s167, 1
        %s172 = smul.addr %s169, 2
        %s173 = sadd.s32 %s171, %s172
        %s174 = smul.addr %s173, 8
        %s175 = scalar_lea.vmem %s0, %s174
        %p176 = pneg %p52
        %p177 = pneg %p49
        %p178 = pneg %p73
        %p179 = pneg %p70
        %p180 = pneg %p94
        %p181 = pneg %p91
        %p182 = pneg %p122
        %p183 = pneg %p119
        %s184 = sand.u32 %s109, 1
        %s185 = scalar_lea.sflag [#allocation3], %s184
        %s186 = sand.u32 %s109, 1
        %s187 = smul.addr %s186, 8
        %s188 = scalar_lea.vmem [#allocation2], %s187
        %s189 = smul.u32 2, %s21
        %p190 = scmp.lt.s32.totalorder %s22, 3
        %s191 = scalar_select %p190, %s22, 3
        %p192 = scmp.lt.s32.totalorder %s189, 1
        %s193 = scalar_select %p192, %s189, 1
        %s194 = smul.addr %s191, 2
        %s195 = sadd.s32 %s193, %s194
        %s196 = smul.addr %s195, 8
        %s197 = scalar_lea.vmem %s0, %s196
        %s198 = smul.u32 2, %s21
        %s199 = smul.u32 2, %s21
        %v201 = vld [vmem:[%s197] sm:$0xff]
        %v202 = vld [vmem:[%s197 + $0x8] sm:$0xff]
        %v203 = vpack.c.bf16 %v202, %v201
        %v204 = vld [vmem:[%s1] sm:$0x3]
        %v205 = vld [vmem:[%s2] sm:$0x1]
        %v207 = vperm.slane %v205, 0
        %vm209 = vcmask 31744
        %v211 = vsel %vm209, %v203, 0
        %vm213 = vcmask 1041408
        %v215 = vsel %vm213, %v204, 0
        %217 = vmatpush.bf16.msra.mxu0 0
        %218 = vmatpush.bf16.msra.mxu0 0
        %219 = vmatpush.bf16.msra.mxu0 0
        %220 = vmatpush.bf16.msra.mxu0 0
        %221 = vmatpush.bf16.msra.mxu0 0
        %222 = vmatpush.bf16.msra.mxu0 0
        %223 = vmatpush.bf16.msra.mxu0 0
        %224 = vmatpush.bf16.msra.mxu0 %v215
        %225 = vmatmul.bf16.gmra.mxu0 %v211
        %v226 = vpop.f32.mrf.mxu0
        %v227 = vadd.f32 %v207, %v226
        %v228 = vpop.f32.mrf.mxu0
        %v229 = vadd.f32 %v207, %v228
        %230 = vdwg.mxu0
        %vm231 = vcmp.gt.f32.partialorder %v227, 0.0
        %vm232 = vcmp.gt.f32.partialorder %v229, 0.0
        %v233 = vmul.f32 %v227, 0.01
        %v234 = vmul.f32 %v229, 0.01
        %v235 = vsel %vm231, %v227, %v233
        %v236 = vsel %vm232, %v229, %v234
        %v237 = vpack.c.bf16 %v235, %v235
        %v238 = vpack.c.bf16 %v236, %v236
        %239 = vst [vmem:[%s188] sm:$0xf] %v237
        %240 = vst [vmem:[%s188 + $0x4] sm:$0xf] %v238
        %s241 = sand.u32 %s109, 1
        %s242 = scalar_lea.sflag [#allocation3], %s241
        %s243 = sand.u32 %s109, 1
        %s244 = smul.addr %s243, 8
        %s245 = scalar_lea.vmem [#allocation2], %s244
        // Predicated region
        $region33: #{tpu_custom_call.1} parent=31 // pred_check
          %p246 = pneg %p119
        $region34: #{tpu_custom_call.1} parent=31 // pred_check_branch
          %248 = sbr.rel (%p246) target = $region36
        $region35: #{tpu_custom_call.1} parent=31 // pred_region
          %s249 = smul.u32 2, %s21
          %251 = vsyncadd %s242, 0
          %s252 = smul.addr %s249, 4
          %s253 = sadd.s32 %s22, %s252
          %s254 = smul.addr %s253, 4
          %s255 = scalar_lea.hbm %s3, %s254
          %s256 = sshll.u32 %s245, 4
          %s257 = int_to_ptr.vmem [resolvable:$true] %s256
          %s258 = sshll.u32 %s255, 4
          %s259 = int_to_ptr.hbm [resolvable:$true] %s258
          %264 = dma.vmem_to_hbm [thread:$0]  %s257, 128, %s259, %s242, 64, 256, 4
        $region36: #{tpu_custom_call.1} parent=31 // pred_fallthru
          _
      $region32: #{tpu_custom_call.1} parent=5 // pred_fallthru
        _
      %p265 = scmp.le.s32.totalorder 2, %s12
      // Predicated region
      $region37: #{tpu_custom_call.1} parent=5 // pred_check
        %p266 = pneg %p265
      $region38: #{tpu_custom_call.1} parent=5 // pred_check_branch
        %268 = sbr.rel (%p266) target = $region40
      $region39: #{tpu_custom_call.1} parent=5 // pred_region
        %s269 = ssub.s32 %s12, 2
        // Predicated region
        $region41: #{tpu_custom_call.1} parent=39 // pred_check
          %p270 = pneg %p125
        $region42: #{tpu_custom_call.1} parent=39 // pred_check_branch
          %272 = sbr.rel (%p270) target = $region44
        $region43: #{tpu_custom_call.1} parent=39 // pred_region
          %s273 = sand.u32 %s110, 1
          %s274 = scalar_lea.sflag [#allocation3], %s273
          %s275 = sand.u32 %s110, 1
          %s276 = smul.addr %s275, 8
          %s277 = scalar_lea.vmem [#allocation2], %s276
          %279 = dma.done %s274, 128
        $region44: #{tpu_custom_call.1} parent=39 // pred_fallthru
          _
      $region40: #{tpu_custom_call.1} parent=5 // pred_fallthru
        _
    $region6: #{tpu_custom_call.1} parent=1 // loop_footer
      %s16 = sadd.s32 1, %s12
    $region7: #{tpu_custom_call.1} parent=1 // loop_footer_branch
      %11 = sbr.rel target = $region3
    $region8: #{tpu_custom_call.1} parent=1 // loop_exit
      _
    %280 = vsyncpa [#allocation3], 1
    %s281 = scalar_lea.sflag [#allocation3], 1
    %282 = vsyncpa %s281, 1

</llo_original>
